<compile_context>
chip_gen: v5e
topology: v5e:2x2
jax: 0.10.0
libtpu: 0.0.40
codegen_flags: <defaults>
</compile_context>

<pallas_src>
import functools

import jax
import jax.numpy as jnp
from jax.experimental import pallas as pl
from jax.experimental.pallas import tpu as pltpu


def _round_up(x, m):
    return ((x + m - 1) // m) * m


def _vmem_capacity_bytes():
    """Per-TensorCore VMEM capacity heuristic (conservative for unknown chips)."""
    try:
        kind = jax.devices()[0].device_kind.lower()
    except Exception:
        kind = ""
    if ("v5" in kind) or ("v6" in kind):
        return 128 << 20
    return 64 << 20          # v7x has 64 MiB/TC; also a safe default


def _pick_tiles(n, tile_n, tile_k):
    """Clamp tiles to the padded problem and keep tile_k a multiple of tile_n."""
    n128 = _round_up(max(n, 1), 128)
    tile_n = max(128, min(_round_up(tile_n, 128), n128))
    if n128 >= 256:                       # prefer >=2 row tiles (v7x dual-TC)
        tile_n = min(tile_n, max(128, (n128 // 2) // 128 * 128))
    tile_k = max(128, min(_round_up(tile_k, 128), n128))
    tile_k = _round_up(max(tile_k, tile_n), tile_n)
    return tile_n, tile_k


def sage_block_kernel(nb_ref, blk_ref, a_ref, dinv_ref, xs_ref, xr_ref,
                      wl_ref, wr_ref, shift_ref, o_ref, acc_ref,
                      *, x_resident, tile_k):
    """One (row-tile, compacted-k-block) grid step.

    nb_ref   : (row_tiles,)          SMEM  #non-empty k-blocks per row tile
    blk_ref  : (row_tiles, max_nb)   SMEM  compacted non-empty k-block ids
    a_ref    : (tile_n, tile_k)      int8  edge-count adjacency block
    dinv_ref : (tile_n, 1)           f32   1/deg for this row tile
    xs_ref   : (tile_k, f_in_p) or (n_x_pad, f_in_p)  bf16 source features
    xr_ref   : (tile_n, f_in_p)      bf16  root/self features
    wl_ref   : (f_in_p, f_out_p)     f32   W_l * bn_scale
    wr_ref   : (f_in_p, f_out_p)     f32   W_r * bn_scale
    shift_ref: (1, f_out_p)          f32   bias*bn_scale + bn_shift
    o_ref    : (tile_n, f_out_p)           output block
    acc_ref  : (tile_n, f_in_p)      f32   scratch accumulator for A @ X
    """
    i = pl.program_id(0)
    k = pl.program_id(1)

    @pl.when(k == 0)
    def _():
        acc_ref[...] = jnp.zeros_like(acc_ref)

    # Only accumulate for real (non-empty) k-blocks of this row tile; padding
    # steps revisit the previous block index (no re-DMA) and skip the matmul.
    @pl.when(k < nb_ref[i])
    def _():
        # int8 -> f32 -> bf16 (guaranteed-supported convert chain; VPU has slack).
        a = a_ref[...].astype(jnp.float32).astype(jnp.bfloat16)
        if x_resident:
            start = pl.multiple_of(blk_ref[i, k] * tile_k, tile_k)
            xs = xs_ref[pl.ds(start, tile_k), :]
        else:
            xs = xs_ref[...]
        acc_ref[...] += jnp.dot(a, xs, preferred_element_type=jnp.float32)

    @pl.when(k == pl.num_programs(1) - 1)
    def _():
        # Mean aggregation: multiply the exact-count sum by 1/deg (f32, exact-ish).
        aggr = acc_ref[...] * dinv_ref[...]
        h = jnp.dot(aggr, wl_ref[...], preferred_element_type=jnp.float32)
        h = h + jnp.dot(xr_ref[...].astype(jnp.float32), wr_ref[...],
                        preferred_element_type=jnp.float32)
        h = h + shift_ref[...]
        # ReLU; dropout is identity in eval mode.
        o_ref[...] = jnp.maximum(h, 0.0).astype(o_ref.dtype)


@functools.partial(jax.jit, static_argnames=("tile_n", "tile_k", "x_resident",
                                              "vmem_cap", "out_dtype"))
def _sage_block_call(nb, blk_ids, a_pad, deg_inv, x_pad, wl, wr, shift,
                     *, tile_n, tile_k, x_resident, vmem_cap, out_dtype):
    n_rows_pad, n_cols_pad = a_pad.shape
    f_in_pad = x_pad.shape[1]
    f_out_pad = wl.shape[1]
    row_tiles = n_rows_pad // tile_n
    max_nb = blk_ids.shape[1]
    grid = (row_tiles, max_nb)

    def kblk(i, k, nb_ref, blk_ref):
        # Clamp so padding steps (k >= nb[i]) re-use the previous block index.
        kk = jnp.maximum(jnp.minimum(k, nb_ref[i] - 1), 0)
        return blk_ref[i, kk]

    if x_resident:
        xs_spec = pl.BlockSpec((n_cols_pad, f_in_pad), lambda i, k, nb, blk: (0, 0))
    else:
        xs_spec = pl.BlockSpec((tile_k, f_in_pad),
                               lambda i, k, nb, blk: (kblk(i, k, nb, blk), 0))

    # Rough per-step VMEM working set (double-buffered blocked operands,
    # resident weights / X, accumulator) used as an explicit scoped limit.
    xs_bytes = (n_cols_pad if x_resident else tile_k) * f_in_pad * 2
    est = (2 * (tile_n * tile_k * 1          # int8 adjacency block
                + xs_bytes                   # source features
                + tile_n * f_in_pad * 2      # root features
                + tile_n * 4                 # deg_inv
                + tile_n * f_out_pad * 4)    # output block
           + 4 * f_in_pad * f_out_pad * 4    # wl + wr (double buffered)
           + 2 * f_out_pad * 4               # shift
           + tile_n * f_in_pad * 4)          # accumulator scratch
    vmem_limit = int(min(int(0.75 * vmem_cap), max(est + (4 << 20), 32 << 20)))

    kernel = functools.partial(sage_block_kernel,
                               x_resident=x_resident, tile_k=tile_k)

    return pl.pallas_call(
        kernel,
        out_shape=jax.ShapeDtypeStruct((n_rows_pad, f_out_pad), out_dtype),
        grid_spec=pltpu.PrefetchScalarGridSpec(
            num_scalar_prefetch=2,
            grid=grid,
            in_specs=[
                pl.BlockSpec((tile_n, tile_k),
                             lambda i, k, nb, blk: (i, kblk(i, k, nb, blk))),
                pl.BlockSpec((tile_n, 1), lambda i, k, nb, blk: (i, 0)),
                xs_spec,
                pl.BlockSpec((tile_n, f_in_pad), lambda i, k, nb, blk: (i, 0)),
                pl.BlockSpec((f_in_pad, f_out_pad), lambda i, k, nb, blk: (0, 0)),
                pl.BlockSpec((f_in_pad, f_out_pad), lambda i, k, nb, blk: (0, 0)),
                pl.BlockSpec((1, f_out_pad), lambda i, k, nb, blk: (0, 0)),
            ],
            out_specs=pl.BlockSpec((tile_n, f_out_pad), lambda i, k, nb, blk: (i, 0)),
            scratch_shapes=[pltpu.VMEM((tile_n, f_in_pad), jnp.float32)],
        ),
        compiler_params=pltpu.CompilerParams(
            dimension_semantics=("parallel", "arbitrary"),
            vmem_limit_bytes=vmem_limit),
    )(nb, blk_ids, a_pad, deg_inv, x_pad, x_pad, wl, wr, shift)


def sage_block(x, edge_index, w_l, w_r, bias, gamma, beta, run_mean, run_var,
               *, eps=1e-5, tile_n=512, tile_k=2048, resident_x=None,
               out_dtype=jnp.float32):
    """SAGEBlock forward (eval mode).

    x: (N, F_in) f32, edge_index: (2, E) int32 (src=row0, dst=row1),
    w_l/w_r: (F_in, F_out), bias/gamma/beta/run_mean/run_var: (F_out,).
    Zero in-degree nodes get aggr = 0 (PyG mean-aggregation convention).
    """
    n, f_in = x.shape
    f_out = w_l.shape[1]
    tile_n, tile_k = _pick_tiles(n, tile_n, tile_k)

    f_in_pad = _round_up(f_in, 128)
    f_out_pad = _round_up(f_out, 128)
    n_rows_pad = _round_up(n, tile_n)
    n_cols_pad = _round_up(n, tile_k)          # >= n_rows_pad (tile_k % tile_n == 0)
    row_tiles = n_rows_pad // tile_n
    k_tiles = n_cols_pad // tile_k

    # Fold eval-mode BatchNorm1d and the SAGEConv bias into weights + shift.
    bn_scale = gamma / jnp.sqrt(run_var + eps)
    bn_shift = beta - run_mean * bn_scale
    wl_pad = jnp.pad((w_l * bn_scale[None, :]).astype(jnp.float32),
                     ((0, f_in_pad - f_in), (0, f_out_pad - f_out)))
    wr_pad = jnp.pad((w_r * bn_scale[None, :]).astype(jnp.float32),
                     ((0, f_in_pad - f_in), (0, f_out_pad - f_out)))
    shift_pad = jnp.pad((bias * bn_scale + bn_shift).astype(jnp.float32)[None, :],
                        ((0, 0), (0, f_out_pad - f_out)))

    # Exact integer edge-count adjacency (1 byte/entry) + f32 inverse degree.
    src, dst = edge_index[0], edge_index[1]
    counts = jnp.zeros((n_rows_pad, n_cols_pad), jnp.float32).at[dst, src].add(1.0)
    # TODO(synk): for very large graphs, build the int8 adjacency without the
    # transient f32 counts (segment-sorted COO / host-side construction).
    a_pad = jnp.minimum(counts, 127.0).astype(jnp.int8)
    deg = jnp.zeros((n_rows_pad,), jnp.float32).at[dst].add(1.0)
    deg_inv = (1.0 / jnp.maximum(deg, 1.0)).reshape(n_rows_pad, 1)

    # Per-row-tile compacted list of non-empty adjacency k-blocks (block-sparse skip).
    occ = counts.reshape(row_tiles, tile_n, k_tiles, tile_k).sum(axis=(1, 3)) > 0.0
    nb = occ.sum(axis=1).astype(jnp.int32)                       # (row_tiles,)
    max_nb = max(int(jax.device_get(jnp.max(nb))), 1)
    kidx = jnp.arange(k_tiles, dtype=jnp.int32)[None, :]
    key = jnp.where(occ, kidx, kidx + k_tiles)                   # non-empty first, ascending
    blk_ids = jnp.argsort(key, axis=1)[:, :max_nb].astype(jnp.int32)

    # Source/root features, bf16, padded once at final shape.
    x_pad = jnp.pad(x.astype(jnp.bfloat16),
                    ((0, n_cols_pad - n), (0, f_in_pad - f_in)))

    vmem_cap = _vmem_capacity_bytes()
    if resident_x is None:
        resident_x = 2 * n_cols_pad * f_in_pad * 2 <= vmem_cap // 4
    resident_x = bool(resident_x)

    out = _sage_block_call(nb, blk_ids, a_pad, deg_inv, x_pad, wl_pad, wr_pad,
                           shift_pad, tile_n=tile_n, tile_k=tile_k,
                           x_resident=resident_x, vmem_cap=vmem_cap,
                           out_dtype=out_dtype)
    return out[:n, :f_out]


def reference_sage_block(x, edge_index, w_l, w_r, bias, gamma, beta,
                         run_mean, run_var, eps=1e-5):
    """Pure-JAX reference mirroring the kernel's rounding points (bf16 x, f32 rest)."""
    n = x.shape[0]
    src, dst = edge_index[0], edge_index[1]
    counts = jnp.zeros((n, n), jnp.float32).at[dst, src].add(1.0)
    deg = counts.sum(axis=1, keepdims=True)
    xb = x.astype(jnp.bfloat16)
    aggr = jnp.dot(counts.astype(jnp.bfloat16), xb,
                   preferred_element_type=jnp.float32) / jnp.maximum(deg, 1.0)
    bn_scale = gamma / jnp.sqrt(run_var + eps)
    bn_shift = beta - run_mean * bn_scale
    wl = w_l * bn_scale[None, :]
    wr = w_r * bn_scale[None, :]
    shift = bias * bn_scale + bn_shift
    h = aggr @ wl + xb.astype(jnp.float32) @ wr + shift[None, :]
    return jnp.maximum(h, 0.0)   # dropout is identity in eval mode


if __name__ == "__main__":
    key = jax.random.PRNGKey(0)

    # ----- Test 1: small graph, auto tiles, resident-X path -----
    k_x, k_e, k_wl, k_wr, k_b = jax.random.split(key, 5)
    N, E, F_IN, F_OUT = 64, 256, 16, 32
    x = jax.random.normal(k_x, (N, F_IN), jnp.float32)
    edge_index = jax.random.randint(k_e, (2, E), 0, N, jnp.int32)
    w_l = jax.random.normal(k_wl, (F_IN, F_OUT), jnp.float32) * 0.1
    w_r = jax.random.normal(k_wr, (F_IN, F_OUT), jnp.float32) * 0.1
    bias = jax.random.normal(k_b, (F_OUT,), jnp.float32) * 0.01
    gamma = jnp.ones((F_OUT,), jnp.float32)
    beta = jnp.zeros((F_OUT,), jnp.float32)
    run_mean = jnp.zeros((F_OUT,), jnp.float32)
    run_var = jnp.ones((F_OUT,), jnp.float32)

    out = sage_block(x, edge_index, w_l, w_r, bias, gamma, beta, run_mean, run_var)
    out = jax.block_until_ready(out)
    ref = reference_sage_block(x, edge_index, w_l, w_r, bias, gamma, beta,
                               run_mean, run_var)
    assert out.shape == (N, F_OUT)
    assert jnp.allclose(out, ref, atol=2e-3, rtol=2e-3), "test1 mismatch vs reference"

    # ----- Test 2: multi-tile block-sparse graph, blocked-X path, real BN stats -----
    k2 = jax.random.split(jax.random.PRNGKey(1), 10)
    N2, F_IN2, F_OUT2 = 300, 48, 96
    x2 = jax.random.normal(k2[0], (N2, F_IN2), jnp.float32)
    # Structured edges -> some (row-tile, k-block) adjacency blocks are empty.
    eA = jax.random.randint(k2[1], (2, 400), 0, 100, jnp.int32)          # block (0,0)
    eB = jnp.stack([jax.random.randint(k2[2], (400,), 0, 100, jnp.int32),
                    jax.random.randint(k2[3], (400,), 256, N2, jnp.int32)])  # block (2,0)
    eC = jax.random.randint(k2[4], (2, 400), 256, N2, jnp.int32)         # block (2,2)
    edge_index2 = jnp.concatenate([eA, eB, eC], axis=1)
    w_l2 = jax.random.normal(k2[5], (F_IN2, F_OUT2), jnp.float32) * 0.1
    w_r2 = jax.random.normal(k2[6], (F_IN2, F_OUT2), jnp.float32) * 0.1
    bias2 = jax.random.normal(k2[7], (F_OUT2,), jnp.float32) * 0.01
    gamma2 = jax.random.uniform(k2[8], (F_OUT2,), jnp.float32, 0.5, 1.5)
    beta2 = jax.random.normal(k2[9], (F_OUT2,), jnp.float32) * 0.1
    run_mean2 = jax.random.normal(k2[8], (F_OUT2,), jnp.float32) * 0.1
    run_var2 = jax.random.uniform(k2[9], (F_OUT2,), jnp.float32, 0.5, 1.5)

    out2 = sage_block(x2, edge_index2, w_l2, w_r2, bias2, gamma2, beta2,
                      run_mean2, run_var2, tile_n=128, tile_k=128,
                      resident_x=False)
    out2 = jax.block_until_ready(out2)
    ref2 = reference_sage_block(x2, edge_index2, w_l2, w_r2, bias2, gamma2, beta2,
                                run_mean2, run_var2)
    assert out2.shape == (N2, F_OUT2)
    assert jnp.allclose(out2, ref2, atol=2e-3, rtol=2e-3), "test2 mismatch vs reference"

    print("KERNEL_OK")
</pallas_src>

<mosaic_0001>
module attributes {stable_mosaic.version = 11 : i64} {
  func.func @sage_block_kernel(%arg0: i32, %arg1: i32, %arg2: memref<1xi32, #tpu.memory_space<smem>>, %arg3: memref<1x1xi32, #tpu.memory_space<smem>>, %arg4: memref<128x128xi8, #tpu.memory_space<vmem>>, %arg5: memref<128x1xf32, #tpu.memory_space<vmem>>, %arg6: memref<128x128xbf16, #tpu.memory_space<vmem>>, %arg7: memref<128x128xbf16, #tpu.memory_space<vmem>>, %arg8: memref<128x128xf32, #tpu.memory_space<vmem>>, %arg9: memref<128x128xf32, #tpu.memory_space<vmem>>, %arg10: memref<1x128xf32, #tpu.memory_space<vmem>>, %arg11: memref<128x128xf32, #tpu.memory_space<vmem>>, %arg12: memref<128x128xf32, #tpu.memory_space<vmem>>) attributes {dimension_semantics = [#tpu.dimension_semantics<parallel>, #tpu.dimension_semantics<arbitrary>], iteration_bounds = array<i64: 1, 1>, scalar_prefetch = 2 : i64, scratch_operands = 1 : i64, tpu.core_type = #tpu.core_type<tc>, window_params = [{transform_indices = @transform_0, window_bounds = array<i64: 128, 128>}, {transform_indices = @transform_1, window_bounds = array<i64: 128, 1>}, {pipeline_mode = #tpu.pipeline_mode<synchronous>, transform_indices = @transform_2, window_bounds = array<i64: 128, 128>}, {transform_indices = @transform_3, window_bounds = array<i64: 128, 128>}, {pipeline_mode = #tpu.pipeline_mode<synchronous>, transform_indices = @transform_4, window_bounds = array<i64: 128, 128>}, {pipeline_mode = #tpu.pipeline_mode<synchronous>, transform_indices = @transform_5, window_bounds = array<i64: 128, 128>}, {pipeline_mode = #tpu.pipeline_mode<synchronous>, transform_indices = @transform_6, window_bounds = array<i64: 1, 128>}, {transform_indices = @transform_7, window_bounds = array<i64: 128, 128>}]} {
    %c0_i32 = arith.constant 0 : i32
    %0 = arith.cmpi eq, %arg1, %c0_i32 : i32
    %1 = arith.extui %0 : i1 to i32
    %c0_i32_0 = arith.constant 0 : i32
    %2 = arith.cmpi ne, %1, %c0_i32_0 : i32
    scf.if %2 {
      %cst = arith.constant 0.000000e+00 : f32
      %11 = vector.broadcast %cst : f32 to vector<128x128xf32>
      %c0 = arith.constant 0 : index
      %c0_4 = arith.constant 0 : index
      %12 = vector.load %arg12[%c0, %c0_4] : memref<128x128xf32, #tpu.memory_space<vmem>>, vector<128x128xf32>
      tpu.vector_store %arg12[%c0, %c0_4], %11 {strides = array<i32>} : memref<128x128xf32, #tpu.memory_space<vmem>>, vector<128x128xf32>,
    } else {
    }
    %3 = arith.index_cast %arg0 : i32 to index
    %4 = memref.load %arg2[%3] : memref<1xi32, #tpu.memory_space<smem>>
    %5 = arith.cmpi slt, %arg1, %4 : i32
    %6 = arith.extui %5 : i1 to i32
    %c0_i32_1 = arith.constant 0 : i32
    %7 = arith.cmpi ne, %6, %c0_i32_1 : i32
    scf.if %7 {
      %c0 = arith.constant 0 : index
      %c0_4 = arith.constant 0 : index
      %11 = vector.load %arg4[%c0, %c0_4] : memref<128x128xi8, #tpu.memory_space<vmem>>, vector<128x128xi8>
      %12 = arith.sitofp %11 : vector<128x128xi8> to vector<128x128xf32>
      %13 = arith.truncf %12 : vector<128x128xf32> to vector<128x128xbf16>
      %14 = arith.index_cast %arg0 : i32 to index
      %15 = arith.index_cast %arg1 : i32 to index
      %16 = memref.load %arg3[%14, %15] : memref<1x1xi32, #tpu.memory_space<smem>>
      %c128_i32 = arith.constant 128 : i32
      %17 = arith.muli %16, %c128_i32 : i32
      %18 = tpu.assume_multiple %17, 128 : i32
      %19 = arith.index_cast %18 : i32 to index
      %c0_5 = arith.constant 0 : index
      %20 = vector.load %arg6[%19, %c0_5] : memref<128x128xbf16, #tpu.memory_space<vmem>>, vector<128x128xbf16>
      %c0_6 = arith.constant 0 : index
      %c0_7 = arith.constant 0 : index
      %21 = vector.load %arg12[%c0_6, %c0_7] : memref<128x128xf32, #tpu.memory_space<vmem>>, vector<128x128xf32>
      %cst = arith.constant dense<0.000000e+00> : vector<128x128xf32>
      %22 = tpu.matmul %13, %20, %cst {dimension_numbers = #tpu.dot_dimension_numbers<[1], [0], [0], [1], [0, 0, 1, 1], [], []>} : vector<128x128xbf16>, vector<128x128xbf16>, vector<128x128xf32> -> vector<128x128xf32>
      %23 = arith.addf %21, %22 : vector<128x128xf32>
      %c0_8 = arith.constant 0 : index
      %c0_9 = arith.constant 0 : index
      %24 = vector.load %arg12[%c0_8, %c0_9] : memref<128x128xf32, #tpu.memory_space<vmem>>, vector<128x128xf32>
      tpu.vector_store %arg12[%c0_8, %c0_9], %23 {strides = array<i32>} : memref<128x128xf32, #tpu.memory_space<vmem>>, vector<128x128xf32>,
    } else {
    }
    %c0_i32_2 = arith.constant 0 : i32
    %8 = arith.cmpi eq, %arg1, %c0_i32_2 : i32
    %9 = arith.extui %8 : i1 to i32
    %c0_i32_3 = arith.constant 0 : i32
    %10 = arith.cmpi ne, %9, %c0_i32_3 : i32
    scf.if %10 {
      %c0 = arith.constant 0 : index
      %c0_4 = arith.constant 0 : index
      %11 = vector.load %arg12[%c0, %c0_4] : memref<128x128xf32, #tpu.memory_space<vmem>>, vector<128x128xf32>
      %c0_5 = arith.constant 0 : index
      %c0_6 = arith.constant 0 : index
      %12 = vector.load %arg5[%c0_5, %c0_6] : memref<128x1xf32, #tpu.memory_space<vmem>>, vector<128x1xf32>
      %13 = vector.broadcast %12 : vector<128x1xf32> to vector<128x128xf32>
      %14 = arith.mulf %11, %13 : vector<128x128xf32>
      %c0_7 = arith.constant 0 : index
      %c0_8 = arith.constant 0 : index
      %15 = vector.load %arg8[%c0_7, %c0_8] : memref<128x128xf32, #tpu.memory_space<vmem>>, vector<128x128xf32>
      %cst = arith.constant dense<0.000000e+00> : vector<128x128xf32>
      %16 = tpu.matmul %14, %15, %cst {dimension_numbers = #tpu.dot_dimension_numbers<[1], [0], [0], [1], [0, 0, 1, 1], [], []>} : vector<128x128xf32>, vector<128x128xf32>, vector<128x128xf32> -> vector<128x128xf32>
      %c0_9 = arith.constant 0 : index
      %c0_10 = arith.constant 0 : index
      %17 = vector.load %arg7[%c0_9, %c0_10] : memref<128x128xbf16, #tpu.memory_space<vmem>>, vector<128x128xbf16>
      %18 = arith.extf %17 : vector<128x128xbf16> to vector<128x128xf32>
      %c0_11 = arith.constant 0 : index
      %c0_12 = arith.constant 0 : index
      %19 = vector.load %arg9[%c0_11, %c0_12] : memref<128x128xf32, #tpu.memory_space<vmem>>, vector<128x128xf32>
      %cst_13 = arith.constant dense<0.000000e+00> : vector<128x128xf32>
      %20 = tpu.matmul %18, %19, %cst_13 {dimension_numbers = #tpu.dot_dimension_numbers<[1], [0], [0], [1], [0, 0, 1, 1], [], []>} : vector<128x128xf32>, vector<128x128xf32>, vector<128x128xf32> -> vector<128x128xf32>
      %21 = arith.addf %16, %20 : vector<128x128xf32>
      %c0_14 = arith.constant 0 : index
      %c0_15 = arith.constant 0 : index
      %22 = vector.load %arg10[%c0_14, %c0_15] : memref<1x128xf32, #tpu.memory_space<vmem>>, vector<1x128xf32>
      %23 = vector.broadcast %22 : vector<1x128xf32> to vector<128x128xf32>
      %24 = arith.addf %21, %23 : vector<128x128xf32>
      %cst_16 = arith.constant 0.000000e+00 : f32
      %25 = vector.broadcast %cst_16 : f32 to vector<128x128xf32>
      %26 = arith.maximumf %24, %25 : vector<128x128xf32>
      %c0_17 = arith.constant 0 : index
      %c0_18 = arith.constant 0 : index
      %27 = vector.load %arg11[%c0_17, %c0_18] : memref<128x128xf32, #tpu.memory_space<vmem>>, vector<128x128xf32>
      tpu.vector_store %arg11[%c0_17, %c0_18], %26 {strides = array<i32>} : memref<128x128xf32, #tpu.memory_space<vmem>>, vector<128x128xf32>,
    } else {
    }
    return
  }
  func.func @transform_0(%arg0: i32, %arg1: i32, %arg2: memref<1xi32, #tpu.memory_space<smem>>, %arg3: memref<1x1xi32, #tpu.memory_space<smem>>) -> (i32, i32) {
    %0 = arith.index_cast %arg0 : i32 to index
    %1 = memref.load %arg2[%0] : memref<1xi32, #tpu.memory_space<smem>>
    %c1_i32 = arith.constant 1 : i32
    %2 = arith.subi %1, %c1_i32 : i32
    %3 = arith.minsi %arg1, %2 : i32
    %c0_i32 = arith.constant 0 : i32
    %4 = arith.maxsi %3, %c0_i32 : i32
    %5 = arith.index_cast %arg0 : i32 to index
    %6 = arith.index_cast %4 : i32 to index
    %7 = memref.load %arg3[%5, %6] : memref<1x1xi32, #tpu.memory_space<smem>>
    %c0_i32_0 = arith.constant 0 : i32
    return %arg0, %7 : i32, i32
  }
  func.func @transform_1(%arg0: i32, %arg1: i32, %arg2: memref<1xi32, #tpu.memory_space<smem>>, %arg3: memref<1x1xi32, #tpu.memory_space<smem>>) -> (i32, i32) {
    %c0_i32 = arith.constant 0 : i32
    %c0_i32_0 = arith.constant 0 : i32
    return %arg0, %c0_i32 : i32, i32
  }
  func.func @transform_2(%arg0: i32, %arg1: i32, %arg2: memref<1xi32, #tpu.memory_space<smem>>, %arg3: memref<1x1xi32, #tpu.memory_space<smem>>) -> (i32, i32) {
    %c0_i32 = arith.constant 0 : i32
    %c0_i32_0 = arith.constant 0 : i32
    %c0_i32_1 = arith.constant 0 : i32
    return %c0_i32, %c0_i32_0 : i32, i32
  }
  func.func @transform_3(%arg0: i32, %arg1: i32, %arg2: memref<1xi32, #tpu.memory_space<smem>>, %arg3: memref<1x1xi32, #tpu.memory_space<smem>>) -> (i32, i32) {
    %c0_i32 = arith.constant 0 : i32
    %c0_i32_0 = arith.constant 0 : i32
    return %arg0, %c0_i32 : i32, i32
  }
  func.func @transform_4(%arg0: i32, %arg1: i32, %arg2: memref<1xi32, #tpu.memory_space<smem>>, %arg3: memref<1x1xi32, #tpu.memory_space<smem>>) -> (i32, i32) {
    %c0_i32 = arith.constant 0 : i32
    %c0_i32_0 = arith.constant 0 : i32
    %c0_i32_1 = arith.constant 0 : i32
    return %c0_i32, %c0_i32_0 : i32, i32
  }
  func.func @transform_5(%arg0: i32, %arg1: i32, %arg2: memref<1xi32, #tpu.memory_space<smem>>, %arg3: memref<1x1xi32, #tpu.memory_space<smem>>) -> (i32, i32) {
    %c0_i32 = arith.constant 0 : i32
    %c0_i32_0 = arith.constant 0 : i32
    %c0_i32_1 = arith.constant 0 : i32
    return %c0_i32, %c0_i32_0 : i32, i32
  }
  func.func @transform_6(%arg0: i32, %arg1: i32, %arg2: memref<1xi32, #tpu.memory_space<smem>>, %arg3: memref<1x1xi32, #tpu.memory_space<smem>>) -> (i32, i32) {
    %c0_i32 = arith.constant 0 : i32
    %c0_i32_0 = arith.constant 0 : i32
    %c0_i32_1 = arith.constant 0 : i32
    return %c0_i32, %c0_i32_0 : i32, i32
  }
  func.func @transform_7(%arg0: i32, %arg1: i32, %arg2: memref<1xi32, #tpu.memory_space<smem>>, %arg3: memref<1x1xi32, #tpu.memory_space<smem>>) -> (i32, i32) {
    %c0_i32 = arith.constant 0 : i32
    %c0_i32_0 = arith.constant 0 : i32
    return %arg0, %c0_i32 : i32, i32
  }
}

</mosaic_0001>

<llo_original>
// kernel: _sage_block_call.1
$region0: #{_sage_block_call.1}
  #allocation0 [shape = 'u32[]', space=smem, size = 0x4, offset = 0x4, fixed_abs, tag = 'smem constant byte address 0x4 - core index']
  #allocation1 [shape = 'u32[72,128]{1,0:T(1,128)}', space=vmem, size = 0x9000, scoped, tag = 'internal scratch']
  #allocation2 [shape = 'f32[128,128]{1,0:T(8,128)}', space=vmem, size = 0x10000, scoped, tag = 'scratch operand']
  #allocation3 [shape = 's32[1]{0}', space=sflag, size = 0x4, scoped, tag = 'scoped memory for _sage_block_call.1']
  #allocation4 [shape = 's32[1]{0:T(128)S(6)}', space=smem, size = 0x200, scoped, tag = 'prefetched SMEM operand 0']
  #allocation5 [shape = 's32[1,1]{1,0:T(1,128)S(6)}', space=smem, size = 0x200, scoped, tag = 'prefetched SMEM operand 1']
  %s0 = inlined_call_operand.<no memory space> [shape: s32[1], index: 0, kind: input, shape index: {}]
  %s1 = inlined_call_operand.<no memory space> [shape: s32[1,1], index: 1, kind: input, shape index: {}]
  %s2 = inlined_call_operand.hbm [shape: s8[128,128], index: 2, kind: input, shape index: {}]
  %s3 = inlined_call_operand.vmem [shape: f32[128,1], index: 3, kind: input, shape index: {}]
  %s4 = inlined_call_operand.hbm [shape: bf16[128,128], index: 4, kind: input, shape index: {}, may-alias: {4,5}]
  %s5 = inlined_call_operand.hbm [shape: bf16[128,128], index: 5, kind: input, shape index: {}, may-alias: {4,5}]
  %s6 = inlined_call_operand.vmem [shape: f32[128,128], index: 6, kind: input, shape index: {}]
  %s7 = inlined_call_operand.hbm [shape: f32[128,128], index: 7, kind: input, shape index: {}]
  %s8 = inlined_call_operand.vmem [shape: f32[1,128], index: 8, kind: input, shape index: {}]
  %s9 = inlined_call_operand.hbm [shape: f32[128,128], index: 9, kind: output, shape index: {}]
  %s10 = sld [smem:[#allocation0]]
  $region66: #{_sage_block_call.1} parent=0
    _
  %s12 = ssub.s32 1, %s10
  %s13 = scalar_select 0, %s12, %s10
  %14 = sst [smem:[#allocation4]] %s0
  %15 = sst [smem:[#allocation5]] %s1
  $region1: #{_sage_block_call.1} parent=0
    #allocation6 [shape = 'u8[16384]{0}', space=vmem, size = 0x4000, scoped, tag = 'input window, operand 2, single buffered']
    #allocation7 [shape = 's32[1]{0}', space=sflag, size = 0x4, scoped, tag = 'scoped memory for _sage_block_call.1']
    #allocation8 [shape = 's32[1]{0}', space=sflag, size = 0x4, scoped, tag = 'scoped memory for _sage_block_call.1']
    #allocation9 [shape = 'u8[32768]{0}', space=vmem, size = 0x8000, scoped, tag = 'input window, operand 4, single buffered']
    #allocation10 [shape = 's32[1]{0}', space=sflag, size = 0x4, scoped, tag = 'scoped memory for _sage_block_call.1']
    #allocation11 [shape = 'u8[32768]{0}', space=vmem, size = 0x8000, scoped, tag = 'input window, operand 5, single buffered']
    #allocation12 [shape = 'u8[65536]{0}', space=vmem, size = 0x10000, scoped, tag = 'input window, operand 7, single buffered']
    #allocation13 [shape = 's32[1]{0}', space=sflag, size = 0x4, scoped, tag = 'scoped memory for _sage_block_call.1']
    #allocation14 [shape = 'u8[65536]{0}', space=vmem, size = 0x10000, scoped, tag = 'output window, operand 0, single buffered']
    %16 = vsyncpa [#allocation7], 0
    %17 = vsyncpa [#allocation10], 0
    %18 = vsyncpa [#allocation13], 0
    %19 = vsyncpa [#allocation8], 0
    // Predicated region
    $region2: #{_sage_block_call.1} parent=1 // pred_check
      _
    $region3: #{_sage_block_call.1} parent=1 // pred_check_branch
      %21 = sbr.rel (0) target = $region5
    $region4: #{_sage_block_call.1} parent=1 // pred_region
      %s22 = sld [smem:[#allocation4]]
      %s23 = ssub.s32 %s22, 1
      %p24 = scmp.lt.s32.totalorder 0, %s23
      %s25 = scalar_select %p24, 0, %s23
      %p26 = scmp.gt.s32.totalorder %s25, 0
      %s27 = scalar_select %p26, %s25, 0
      %s28 = sshra.s32 %s27, 7
      %s29 = sand.u32 %s27, 127
      %s30 = sadd.s32 %s28, 0
      %s31 = smul.u32 %s30, 128
      %s32 = sshra.s32 %s27, 7
      %s33 = sand.u32 %s27, 127
      %s34 = sadd.s32 %s31, %s33
      %s35 = sld [smem:[#allocation5 + %s34]]
      %37 = vsyncadd [#allocation7], 0
      %s38 = smul.addr %s35, 8
      %s39 = scalar_lea.hbm %s2, %s38
      %s40 = sshll.u32 %s39, 4
      %s41 = int_to_ptr.hbm [resolvable:$true] %s40
      %s42 = sshll.u32 [#allocation6], 4
      %s43 = int_to_ptr.vmem [resolvable:$true] %s42
      %48 = dma.hbm_to_vmem [thread:$0]  %s41, 512, %s43, [#allocation7], 128, 128, 8
    $region5: #{_sage_block_call.1} parent=1 // pred_fallthru
      _
    // Predicated region
    $region6: #{_sage_block_call.1} parent=1 // pred_check
      _
    $region7: #{_sage_block_call.1} parent=1 // pred_check_branch
      %50 = sbr.rel (0) target = $region9
    $region8: #{_sage_block_call.1} parent=1 // pred_region
      _
    $region9: #{_sage_block_call.1} parent=1 // pred_fallthru
      _
    // Predicated region
    $region10: #{_sage_block_call.1} parent=1 // pred_check
      _
    $region11: #{_sage_block_call.1} parent=1 // pred_check_branch
      %52 = sbr.rel (0) target = $region13
    $region12: #{_sage_block_call.1} parent=1 // pred_region
      %54 = vsyncadd [#allocation10], 0
      %s55 = sshll.u32 %s4, 4
      %s56 = int_to_ptr.hbm [resolvable:$true] %s55
      %s57 = sshll.u32 [#allocation9], 4
      %s58 = int_to_ptr.vmem [resolvable:$true] %s57
      %63 = dma.hbm_to_vmem [thread:$0]  %s56, 1024, %s58, [#allocation10], 64, 64, 4
    $region13: #{_sage_block_call.1} parent=1 // pred_fallthru
      _
    // Predicated region
    $region14: #{_sage_block_call.1} parent=1 // pred_check
      _
    $region15: #{_sage_block_call.1} parent=1 // pred_check_branch
      %65 = sbr.rel (0) target = $region17
    $region16: #{_sage_block_call.1} parent=1 // pred_region
      %67 = vsyncadd [#allocation10], 0
      %s68 = sshll.u32 %s5, 4
      %s69 = int_to_ptr.hbm [resolvable:$true] %s68
      %s70 = sshll.u32 [#allocation11], 4
      %s71 = int_to_ptr.vmem [resolvable:$true] %s70
      %76 = dma.hbm_to_vmem [thread:$0]  %s69, 1024, %s71, [#allocation10], 64, 64, 4
    $region17: #{_sage_block_call.1} parent=1 // pred_fallthru
      _
    // Predicated region
    $region18: #{_sage_block_call.1} parent=1 // pred_check
      _
    $region19: #{_sage_block_call.1} parent=1 // pred_check_branch
      %78 = sbr.rel (0) target = $region21
    $region20: #{_sage_block_call.1} parent=1 // pred_region
      _
    $region21: #{_sage_block_call.1} parent=1 // pred_fallthru
      _
    // Predicated region
    $region22: #{_sage_block_call.1} parent=1 // pred_check
      _
    $region23: #{_sage_block_call.1} parent=1 // pred_check_branch
      %80 = sbr.rel (0) target = $region25
    $region24: #{_sage_block_call.1} parent=1 // pred_region
      %82 = vsyncadd [#allocation13], 0
      %s83 = sshll.u32 %s7, 4
      %s84 = int_to_ptr.hbm [resolvable:$true] %s83
      %s85 = sshll.u32 [#allocation12], 4
      %s86 = int_to_ptr.vmem [resolvable:$true] %s85
      %91 = dma.hbm_to_vmem [thread:$0]  %s84, 2048, %s86, [#allocation13], 128, 128, 8
    $region25: #{_sage_block_call.1} parent=1 // pred_fallthru
      _
    // Predicated region
    $region26: #{_sage_block_call.1} parent=1 // pred_check
      _
    $region27: #{_sage_block_call.1} parent=1 // pred_check_branch
      %93 = sbr.rel (0) target = $region29
    $region28: #{_sage_block_call.1} parent=1 // pred_region
      _
    $region29: #{_sage_block_call.1} parent=1 // pred_fallthru
      _
    // Predicated region
    $region30: #{_sage_block_call.1} parent=1 // pred_check
      _
    $region31: #{_sage_block_call.1} parent=1 // pred_check_branch
      %95 = sbr.rel (0) target = $region33
    $region32: #{_sage_block_call.1} parent=1 // pred_region
      %97 = dma.done [#allocation7], 512
    $region33: #{_sage_block_call.1} parent=1 // pred_fallthru
      _
    // Predicated region
    $region34: #{_sage_block_call.1} parent=1 // pred_check
      _
    $region35: #{_sage_block_call.1} parent=1 // pred_check_branch
      %99 = sbr.rel (0) target = $region37
    $region36: #{_sage_block_call.1} parent=1 // pred_region
      %101 = dma.done [#allocation10], 1024
    $region37: #{_sage_block_call.1} parent=1 // pred_fallthru
      _
    // Predicated region
    $region38: #{_sage_block_call.1} parent=1 // pred_check
      _
    $region39: #{_sage_block_call.1} parent=1 // pred_check_branch
      %103 = sbr.rel (0) target = $region41
    $region40: #{_sage_block_call.1} parent=1 // pred_region
      %105 = dma.done [#allocation10], 1024
    $region41: #{_sage_block_call.1} parent=1 // pred_fallthru
      _
    // Predicated region
    $region42: #{_sage_block_call.1} parent=1 // pred_check
      _
    $region43: #{_sage_block_call.1} parent=1 // pred_check_branch
      %107 = sbr.rel (0) target = $region45
    $region44: #{_sage_block_call.1} parent=1 // pred_region
      %109 = dma.done [#allocation13], 2048
    $region45: #{_sage_block_call.1} parent=1 // pred_fallthru
      _
    %s110 = sld [smem:[#allocation4]]
    %s111 = ssub.s32 %s110, 1
    %p112 = scmp.lt.s32.totalorder 0, %s111
    %s113 = scalar_select %p112, 0, %s111
    %p114 = scmp.gt.s32.totalorder %s113, 0
    %s115 = scalar_select %p114, %s113, 0
    %s116 = sshra.s32 %s115, 7
    %s117 = sand.u32 %s115, 127
    %s118 = sadd.s32 %s116, 0
    %s119 = smul.u32 %s118, 128
    %s120 = sshra.s32 %s115, 7
    %s121 = sand.u32 %s115, 127
    %s122 = sadd.s32 %s119, %s121
    %s123 = sld [smem:[#allocation5 + %s122]]
    %p124 = scmp.eq.s32.totalorder 0, 0
    // Predicated region
    $region46: #{_sage_block_call.1} parent=1 // pred_check
      %p125 = pneg %p124
    $region47: #{_sage_block_call.1} parent=1 // pred_check_branch
      %127 = sbr.rel (%p125) target = $region49
    $region48: #{_sage_block_call.1} parent=1 // pred_region
      %128 = vst [vmem:[#allocation2] sm:$0xff] 0.0
      %129 = vst [vmem:[#allocation2 + $0x8] sm:$0xff] 0.0
      %130 = vst [vmem:[#allocation2 + $0x10] sm:$0xff] 0.0
      %131 = vst [vmem:[#allocation2 + $0x18] sm:$0xff] 0.0
      %132 = vst [vmem:[#allocation2 + $0x20] sm:$0xff] 0.0
      %133 = vst [vmem:[#allocation2 + $0x28] sm:$0xff] 0.0
      %134 = vst [vmem:[#allocation2 + $0x30] sm:$0xff] 0.0
      %135 = vst [vmem:[#allocation2 + $0x38] sm:$0xff] 0.0
      %136 = vst [vmem:[#allocation2 + $0x40] sm:$0xff] 0.0
      %137 = vst [vmem:[#allocation2 + $0x48] sm:$0xff] 0.0
      %138 = vst [vmem:[#allocation2 + $0x50] sm:$0xff] 0.0
      %139 = vst [vmem:[#allocation2 + $0x58] sm:$0xff] 0.0
      %140 = vst [vmem:[#allocation2 + $0x60] sm:$0xff] 0.0
      %141 = vst [vmem:[#allocation2 + $0x68] sm:$0xff] 0.0
      %142 = vst [vmem:[#allocation2 + $0x70] sm:$0xff] 0.0
      %143 = vst [vmem:[#allocation2 + $0x78] sm:$0xff] 0.0
    $region49: #{_sage_block_call.1} parent=1 // pred_fallthru
      _
    %s144 = sld [smem:[#allocation4]]
    %p145 = scmp.lt.s32.totalorder 0, %s144
    // Predicated region
    $region50: #{_sage_block_call.1} parent=1 // pred_check
      %p146 = pneg %p145
    $region51: #{_sage_block_call.1} parent=1 // pred_check_branch
      %148 = sbr.rel (%p146) target = $region53
    $region52: #{_sage_block_call.1} parent=1 // pred_region
      %v149 = vld [vmem:[#allocation6] sm:$0xff]
      %v150 = vld [vmem:[#allocation6 + $0x8] sm:$0xff]
      %v151 = vld [vmem:[#allocation6 + $0x10] sm:$0xff]
      %v152 = vld [vmem:[#allocation6 + $0x18] sm:$0xff]
      %v153 = vunpack.c.0.s8 %v149
      %v154 = vunpack.c.1.s8 %v149
      %v155 = vunpack.c.2.s8 %v149
      %v156 = vunpack.c.3.s8 %v149
      %v157 = vunpack.c.0.s8 %v150
      %v158 = vunpack.c.1.s8 %v150
      %v159 = vunpack.c.2.s8 %v150
      %v160 = vunpack.c.3.s8 %v150
      %v161 = vunpack.c.0.s8 %v151
      %v162 = vunpack.c.1.s8 %v151
      %v163 = vunpack.c.2.s8 %v151
      %v164 = vunpack.c.3.s8 %v151
      %v165 = vunpack.c.0.s8 %v152
      %v166 = vunpack.c.1.s8 %v152
      %v167 = vunpack.c.2.s8 %v152
      %v168 = vunpack.c.3.s8 %v152
      %v169 = vcvt.s32.f32 %v153
      %v170 = vcvt.s32.f32 %v154
      %v171 = vcvt.s32.f32 %v155
      %v172 = vcvt.s32.f32 %v156
      %v173 = vcvt.s32.f32 %v157
      %v174 = vcvt.s32.f32 %v158
      %v175 = vcvt.s32.f32 %v159
      %v176 = vcvt.s32.f32 %v160
      %v177 = vcvt.s32.f32 %v161
      %v178 = vcvt.s32.f32 %v162
      %v179 = vcvt.s32.f32 %v163
      %v180 = vcvt.s32.f32 %v164
      %v181 = vcvt.s32.f32 %v165
      %v182 = vcvt.s32.f32 %v166
      %v183 = vcvt.s32.f32 %v167
      %v184 = vcvt.s32.f32 %v168
      %v185 = vpack.c.bf16 %v170, %v169
      %v186 = vpack.c.bf16 %v172, %v171
      %v187 = vpack.c.bf16 %v174, %v173
      %v188 = vpack.c.bf16 %v176, %v175
      %v189 = vpack.c.bf16 %v178, %v177
      %v190 = vpack.c.bf16 %v180, %v179
      %v191 = vpack.c.bf16 %v182, %v181
      %v192 = vpack.c.bf16 %v184, %v183
      %s193 = sadd.s32 0, 0
      %s194 = smul.u32 %s193, 128
      %s195 = sadd.s32 %s194, 0
      %s196 = sld [smem:[#allocation5 + %s195]]
      %s197 = smul.u32 %s196, 128
      %s198 = sshra.s32 %s197, 3
      %s199 = sand.u32 %s197, 7
      %s200 = smul.addr %s198, 4
      %s201 = scalar_lea.vmem [#allocation9], %s200
      %v202 = vld [vmem:[%s201] sm:$0xf]
      %v203 = vld [vmem:[%s201 + $0x4] sm:$0xf]
      %v204 = vld [vmem:[%s201 + $0x8] sm:$0xf]
      %v205 = vld [vmem:[%s201 + $0xc] sm:$0xf]
      %v206 = vld [vmem:[%s201 + $0x10] sm:$0xf]
      %v207 = vld [vmem:[%s201 + $0x14] sm:$0xf]
      %v208 = vld [vmem:[%s201 + $0x18] sm:$0xf]
      %v209 = vld [vmem:[%s201 + $0x1c] sm:$0xf]
      %v210 = vld [vmem:[%s201 + $0x20] sm:$0xf]
      %v211 = vld [vmem:[%s201 + $0x24] sm:$0xf]
      %v212 = vld [vmem:[%s201 + $0x28] sm:$0xf]
      %v213 = vld [vmem:[%s201 + $0x2c] sm:$0xf]
      %v214 = vld [vmem:[%s201 + $0x30] sm:$0xf]
      %v215 = vld [vmem:[%s201 + $0x34] sm:$0xf]
      %v216 = vld [vmem:[%s201 + $0x38] sm:$0xf]
      %v217 = vld [vmem:[%s201 + $0x3c] sm:$0xf]
      %v218 = vld [vmem:[#allocation2] sm:$0xff]
      %v219 = vld [vmem:[#allocation2 + $0x8] sm:$0xff]
      %v220 = vld [vmem:[#allocation2 + $0x10] sm:$0xff]
      %v221 = vld [vmem:[#allocation2 + $0x18] sm:$0xff]
      %v222 = vld [vmem:[#allocation2 + $0x20] sm:$0xff]
      %v223 = vld [vmem:[#allocation2 + $0x28] sm:$0xff]
      %v224 = vld [vmem:[#allocation2 + $0x30] sm:$0xff]
      %v225 = vld [vmem:[#allocation2 + $0x38] sm:$0xff]
      %v226 = vld [vmem:[#allocation2 + $0x40] sm:$0xff]
      %v227 = vld [vmem:[#allocation2 + $0x48] sm:$0xff]
      %v228 = vld [vmem:[#allocation2 + $0x50] sm:$0xff]
      %v229 = vld [vmem:[#allocation2 + $0x58] sm:$0xff]
      %v230 = vld [vmem:[#allocation2 + $0x60] sm:$0xff]
      %v231 = vld [vmem:[#allocation2 + $0x68] sm:$0xff]
      %v232 = vld [vmem:[#allocation2 + $0x70] sm:$0xff]
      %v233 = vld [vmem:[#allocation2 + $0x78] sm:$0xff]
      %v250 = vunpack.c.l.b16 %v202
      %v251 = vunpack.c.l.b16 %v203
      %v252 = vunpack.c.l.b16 %v204
      %v253 = vunpack.c.l.b16 %v205
      %v254 = vunpack.c.l.b16 %v206
      %v255 = vunpack.c.l.b16 %v207
      %v256 = vunpack.c.l.b16 %v208
      %v257 = vunpack.c.l.b16 %v209
      %v258 = vunpack.c.l.b16 %v210
      %v259 = vunpack.c.l.b16 %v211
      %v260 = vunpack.c.l.b16 %v212
      %v261 = vunpack.c.l.b16 %v213
      %v262 = vunpack.c.l.b16 %v214
      %v263 = vunpack.c.l.b16 %v215
      %v264 = vunpack.c.l.b16 %v216
      %v265 = vunpack.c.l.b16 %v217
      %v266 = vpack.c.b16 %v251, %v250
      %v267 = vpack.c.b16 %v253, %v252
      %v268 = vpack.c.b16 %v255, %v254
      %v269 = vpack.c.b16 %v257, %v256
      %v270 = vpack.c.b16 %v259, %v258
      %v271 = vpack.c.b16 %v261, %v260
      %v272 = vpack.c.b16 %v263, %v262
      %v273 = vpack.c.b16 %v265, %v264
      %282 = vmatpush.bf16.msra.mxu0 %v273
      %283 = vmatpush.bf16.msra.mxu0 %v272
      %284 = vmatpush.bf16.msra.mxu0 %v271
      %285 = vmatpush.bf16.msra.mxu0 %v270
      %286 = vmatpush.bf16.msra.mxu0 %v269
      %287 = vmatpush.bf16.msra.mxu0 %v268
      %288 = vmatpush.bf16.msra.mxu0 %v267
      %289 = vmatpush.bf16.msra.mxu0 %v266
      %290 = vmatmul.bf16.gmra.mxu0 %v185
      %v291 = vpop.f32.mrf.mxu0
      %v292 = vadd.f32 0.0, %v291
      %v293 = vpop.f32.mrf.mxu0
      %v294 = vadd.f32 0.0, %v293
      %295 = vmatmul.bf16.gmra.mxu0 %v186
      %v296 = vpop.f32.mrf.mxu0
      %v297 = vadd.f32 0.0, %v296
      %v298 = vpop.f32.mrf.mxu0
      %v299 = vadd.f32 0.0, %v298
      %300 = vmatmul.bf16.gmra.mxu0 %v187
      %v301 = vpop.f32.mrf.mxu0
      %v302 = vadd.f32 0.0, %v301
      %v303 = vpop.f32.mrf.mxu0
      %v304 = vadd.f32 0.0, %v303
      %305 = vmatmul.bf16.gmra.mxu0 %v188
      %v306 = vpop.f32.mrf.mxu0
      %v307 = vadd.f32 0.0, %v306
      %v308 = vpop.f32.mrf.mxu0
      %v309 = vadd.f32 0.0, %v308
      %310 = vmatmul.bf16.gmra.mxu0 %v189
      %v311 = vpop.f32.mrf.mxu0
      %v312 = vadd.f32 0.0, %v311
      %v313 = vpop.f32.mrf.mxu0
      %v314 = vadd.f32 0.0, %v313
      %315 = vmatmul.bf16.gmra.mxu0 %v190
      %v316 = vpop.f32.mrf.mxu0
      %v317 = vadd.f32 0.0, %v316
      %v318 = vpop.f32.mrf.mxu0
      %v319 = vadd.f32 0.0, %v318
      %320 = vmatmul.bf16.gmra.mxu0 %v191
      %v321 = vpop.f32.mrf.mxu0
      %v322 = vadd.f32 0.0, %v321
      %v323 = vpop.f32.mrf.mxu0
      %v324 = vadd.f32 0.0, %v323
      %325 = vmatmul.bf16.gmra.mxu0 %v192
      %v326 = vpop.f32.mrf.mxu0
      %v327 = vadd.f32 0.0, %v326
      %v328 = vpop.f32.mrf.mxu0
      %v329 = vadd.f32 0.0, %v328
      %330 = vdwg.mxu0
      %v331 = vadd.f32 %v218, %v292
      %v332 = vadd.f32 %v219, %v294
      %v333 = vadd.f32 %v220, %v297
      %v334 = vadd.f32 %v221, %v299
      %v335 = vadd.f32 %v222, %v302
      %v336 = vadd.f32 %v223, %v304
      %v337 = vadd.f32 %v224, %v307
      %v338 = vadd.f32 %v225, %v309
      %v339 = vadd.f32 %v226, %v312
      %v340 = vadd.f32 %v227, %v314
      %v341 = vadd.f32 %v228, %v317
      %v342 = vadd.f32 %v229, %v319
      %v343 = vadd.f32 %v230, %v322
      %v344 = vadd.f32 %v231, %v324
      %v345 = vadd.f32 %v232, %v327
      %v346 = vadd.f32 %v233, %v329
      %347 = vst [vmem:[#allocation2] sm:$0xff] %v331
      %348 = vst [vmem:[#allocation2 + $0x8] sm:$0xff] %v332
      %349 = vst [vmem:[#allocation2 + $0x10] sm:$0xff] %v333
      %350 = vst [vmem:[#allocation2 + $0x18] sm:$0xff] %v334
      %351 = vst [vmem:[#allocation2 + $0x20] sm:$0xff] %v335
      %352 = vst [vmem:[#allocation2 + $0x28] sm:$0xff] %v336
      %353 = vst [vmem:[#allocation2 + $0x30] sm:$0xff] %v337
      %354 = vst [vmem:[#allocation2 + $0x38] sm:$0xff] %v338
      %355 = vst [vmem:[#allocation2 + $0x40] sm:$0xff] %v339
      %356 = vst [vmem:[#allocation2 + $0x48] sm:$0xff] %v340
      %357 = vst [vmem:[#allocation2 + $0x50] sm:$0xff] %v341
      %358 = vst [vmem:[#allocation2 + $0x58] sm:$0xff] %v342
      %359 = vst [vmem:[#allocation2 + $0x60] sm:$0xff] %v343
      %360 = vst [vmem:[#allocation2 + $0x68] sm:$0xff] %v344
      %361 = vst [vmem:[#allocation2 + $0x70] sm:$0xff] %v345
      %362 = vst [vmem:[#allocation2 + $0x78] sm:$0xff] %v346
    $region53: #{_sage_block_call.1} parent=1 // pred_fallthru
      _
    // Predicated region
    $region54: #{_sage_block_call.1} parent=1 // pred_check
      %p363 = pneg %p124
    $region55: #{_sage_block_call.1} parent=1 // pred_check_branch
      %365 = sbr.rel (%p363) target = $region57
    $region56: #{_sage_block_call.1} parent=1 // pred_region
      %v366 = vld [vmem:[#allocation2] sm:$0xff]
      %v367 = vld [vmem:[#allocation2 + $0x8] sm:$0xff]
      %v368 = vld [vmem:[#allocation2 + $0x10] sm:$0xff]
      %v369 = vld [vmem:[#allocation2 + $0x18] sm:$0xff]
      %v370 = vld [vmem:[#allocation2 + $0x20] sm:$0xff]
      %v371 = vld [vmem:[#allocation2 + $0x28] sm:$0xff]
      %v372 = vld [vmem:[#allocation2 + $0x30] sm:$0xff]
      %v373 = vld [vmem:[#allocation2 + $0x38] sm:$0xff]
      %v374 = vld [vmem:[#allocation2 + $0x40] sm:$0xff]
      %v375 = vld [vmem:[#allocation2 + $0x48] sm:$0xff]
      %v376 = vld [vmem:[#allocation2 + $0x50] sm:$0xff]
      %v377 = vld [vmem:[#allocation2 + $0x58] sm:$0xff]
      %v378 = vld [vmem:[#allocation2 + $0x60] sm:$0xff]
      %v379 = vld [vmem:[#allocation2 + $0x68] sm:$0xff]
      %v380 = vld [vmem:[#allocation2 + $0x70] sm:$0xff]
      %v381 = vld [vmem:[#allocation2 + $0x78] sm:$0xff]
      %v382 = vld [vmem:[%s3] sm:$0xff]
      %v383 = vld [vmem:[%s3 + $0x8] sm:$0xff]
      %v384 = vld [vmem:[%s3 + $0x10] sm:$0xff]
      %v385 = vld [vmem:[%s3 + $0x18] sm:$0xff]
      %v386 = vld [vmem:[%s3 + $0x20] sm:$0xff]
      %v387 = vld [vmem:[%s3 + $0x28] sm:$0xff]
      %v388 = vld [vmem:[%s3 + $0x30] sm:$0xff]
      %v389 = vld [vmem:[%s3 + $0x38] sm:$0xff]
      %v390 = vld [vmem:[%s3 + $0x40] sm:$0xff]
      %v391 = vld [vmem:[%s3 + $0x48] sm:$0xff]
      %v392 = vld [vmem:[%s3 + $0x50] sm:$0xff]
      %v393 = vld [vmem:[%s3 + $0x58] sm:$0xff]
      %v394 = vld [vmem:[%s3 + $0x60] sm:$0xff]
      %v395 = vld [vmem:[%s3 + $0x68] sm:$0xff]
      %v396 = vld [vmem:[%s3 + $0x70] sm:$0xff]
      %v397 = vld [vmem:[%s3 + $0x78] sm:$0xff]
      %399 = vset.pattern.permute.xlu0 0
      %400 = vperm.xlu0 %399, %v382
      %v401 = vpop.permute.xlu0 %400
      %404 = vset.pattern.permute.xlu0 0
      %405 = vperm.xlu0 %404, %v383
      %v406 = vpop.permute.xlu0 %405
      %409 = vset.pattern.permute.xlu0 0
      %410 = vperm.xlu0 %409, %v384
      %v411 = vpop.permute.xlu0 %410
      %414 = vset.pattern.permute.xlu0 0
      %415 = vperm.xlu0 %414, %v385
      %v416 = vpop.permute.xlu0 %415
      %419 = vset.pattern.permute.xlu0 0
      %420 = vperm.xlu0 %419, %v386
      %v421 = vpop.permute.xlu0 %420
      %424 = vset.pattern.permute.xlu0 0
      %425 = vperm.xlu0 %424, %v387
      %v426 = vpop.permute.xlu0 %425
      %429 = vset.pattern.permute.xlu0 0
      %430 = vperm.xlu0 %429, %v388
      %v431 = vpop.permute.xlu0 %430
      %434 = vset.pattern.permute.xlu0 0
      %435 = vperm.xlu0 %434, %v389
      %v436 = vpop.permute.xlu0 %435
      %439 = vset.pattern.permute.xlu0 0
      %440 = vperm.xlu0 %439, %v390
      %v441 = vpop.permute.xlu0 %440
      %444 = vset.pattern.permute.xlu0 0
      %445 = vperm.xlu0 %444, %v391
      %v446 = vpop.permute.xlu0 %445
      %449 = vset.pattern.permute.xlu0 0
      %450 = vperm.xlu0 %449, %v392
      %v451 = vpop.permute.xlu0 %450
      %454 = vset.pattern.permute.xlu0 0
      %455 = vperm.xlu0 %454, %v393
      %v456 = vpop.permute.xlu0 %455
      %459 = vset.pattern.permute.xlu0 0
      %460 = vperm.xlu0 %459, %v394
      %v461 = vpop.permute.xlu0 %460
      %464 = vset.pattern.permute.xlu0 0
      %465 = vperm.xlu0 %464, %v395
      %v466 = vpop.permute.xlu0 %465
      %469 = vset.pattern.permute.xlu0 0
      %470 = vperm.xlu0 %469, %v396
      %v471 = vpop.permute.xlu0 %470
      %474 = vset.pattern.permute.xlu0 0
      %475 = vperm.xlu0 %474, %v397
      %v476 = vpop.permute.xlu0 %475
      %v478 = vmul.f32 %v366, %v401
      %v479 = vmul.f32 %v367, %v406
      %v480 = vmul.f32 %v368, %v411
      %v481 = vmul.f32 %v369, %v416
      %v482 = vmul.f32 %v370, %v421
      %v483 = vmul.f32 %v371, %v426
      %v484 = vmul.f32 %v372, %v431
      %v485 = vmul.f32 %v373, %v436
      %v486 = vmul.f32 %v374, %v441
      %v487 = vmul.f32 %v375, %v446
      %v488 = vmul.f32 %v376, %v451
      %v489 = vmul.f32 %v377, %v456
      %v490 = vmul.f32 %v378, %v461
      %v491 = vmul.f32 %v379, %v466
      %v492 = vmul.f32 %v380, %v471
      %v493 = vmul.f32 %v381, %v476
      %v494 = vld [vmem:[%s6] sm:$0xff]
      %v495 = vld [vmem:[%s6 + $0x8] sm:$0xff]
      %v496 = vld [vmem:[%s6 + $0x10] sm:$0xff]
      %v497 = vld [vmem:[%s6 + $0x18] sm:$0xff]
      %v498 = vld [vmem:[%s6 + $0x20] sm:$0xff]
      %v499 = vld [vmem:[%s6 + $0x28] sm:$0xff]
      %v500 = vld [vmem:[%s6 + $0x30] sm:$0xff]
      %v501 = vld [vmem:[%s6 + $0x38] sm:$0xff]
      %v502 = vld [vmem:[%s6 + $0x40] sm:$0xff]
      %v503 = vld [vmem:[%s6 + $0x48] sm:$0xff]
      %v504 = vld [vmem:[%s6 + $0x50] sm:$0xff]
      %v505 = vld [vmem:[%s6 + $0x58] sm:$0xff]
      %v506 = vld [vmem:[%s6 + $0x60] sm:$0xff]
      %v507 = vld [vmem:[%s6 + $0x68] sm:$0xff]
      %v508 = vld [vmem:[%s6 + $0x70] sm:$0xff]
      %v509 = vld [vmem:[%s6 + $0x78] sm:$0xff]
      %v510 = vld [vmem:[#allocation11] sm:$0xf]
      %v511 = vld [vmem:[#allocation11 + $0x4] sm:$0xf]
      %v512 = vld [vmem:[#allocation11 + $0x8] sm:$0xf]
      %v513 = vld [vmem:[#allocation11 + $0xc] sm:$0xf]
      %v514 = vld [vmem:[#allocation11 + $0x10] sm:$0xf]
      %v515 = vld [vmem:[#allocation11 + $0x14] sm:$0xf]
      %v516 = vld [vmem:[#allocation11 + $0x18] sm:$0xf]
      %v517 = vld [vmem:[#allocation11 + $0x1c] sm:$0xf]
      %v518 = vld [vmem:[#allocation11 + $0x20] sm:$0xf]
      %v519 = vld [vmem:[#allocation11 + $0x24] sm:$0xf]
      %v520 = vld [vmem:[#allocation11 + $0x28] sm:$0xf]
      %v521 = vld [vmem:[#allocation11 + $0x2c] sm:$0xf]
      %v522 = vld [vmem:[#allocation11 + $0x30] sm:$0xf]
      %v523 = vld [vmem:[#allocation11 + $0x34] sm:$0xf]
      %v524 = vld [vmem:[#allocation11 + $0x38] sm:$0xf]
      %v525 = vld [vmem:[#allocation11 + $0x3c] sm:$0xf]
      %v526 = vunpack.c.l.bf16 %v510
      %v527 = vunpack.c.l.bf16 %v511
      %v528 = vunpack.c.l.bf16 %v512
      %v529 = vunpack.c.l.bf16 %v513
      %v530 = vunpack.c.l.bf16 %v514
      %v531 = vunpack.c.l.bf16 %v515
      %v532 = vunpack.c.l.bf16 %v516
      %v533 = vunpack.c.l.bf16 %v517
      %v534 = vunpack.c.l.bf16 %v518
      %v535 = vunpack.c.l.bf16 %v519
      %v536 = vunpack.c.l.bf16 %v520
      %v537 = vunpack.c.l.bf16 %v521
      %v538 = vunpack.c.l.bf16 %v522
      %v539 = vunpack.c.l.bf16 %v523
      %v540 = vunpack.c.l.bf16 %v524
      %v541 = vunpack.c.l.bf16 %v525
      %v542 = vld [vmem:[#allocation12] sm:$0xff]
      %v543 = vld [vmem:[#allocation12 + $0x8] sm:$0xff]
      %v544 = vld [vmem:[#allocation12 + $0x10] sm:$0xff]
      %v545 = vld [vmem:[#allocation12 + $0x18] sm:$0xff]
      %v546 = vld [vmem:[#allocation12 + $0x20] sm:$0xff]
      %v547 = vld [vmem:[#allocation12 + $0x28] sm:$0xff]
      %v548 = vld [vmem:[#allocation12 + $0x30] sm:$0xff]
      %v549 = vld [vmem:[#allocation12 + $0x38] sm:$0xff]
      %v550 = vld [vmem:[#allocation12 + $0x40] sm:$0xff]
      %v551 = vld [vmem:[#allocation12 + $0x48] sm:$0xff]
      %v552 = vld [vmem:[#allocation12 + $0x50] sm:$0xff]
      %v553 = vld [vmem:[#allocation12 + $0x58] sm:$0xff]
      %v554 = vld [vmem:[#allocation12 + $0x60] sm:$0xff]
      %v555 = vld [vmem:[#allocation12 + $0x68] sm:$0xff]
      %v556 = vld [vmem:[#allocation12 + $0x70] sm:$0xff]
      %v557 = vld [vmem:[#allocation12 + $0x78] sm:$0xff]
      %558 = vmatpush.msra.mxu0 %v557
      %559 = vmatpush.msra.mxu0 %v556
      %560 = vmatpush.msra.mxu0 %v555
      %561 = vmatpush.msra.mxu0 %v554
      %562 = vmatpush.msra.mxu0 %v553
      %563 = vmatpush.msra.mxu0 %v552
      %564 = vmatpush.msra.mxu0 %v551
      %565 = vmatpush.msra.mxu0 %v550
      %566 = vmatpush.msra.mxu0 %v549
      %567 = vmatpush.msra.mxu0 %v548
      %568 = vmatpush.msra.mxu0 %v547
      %569 = vmatpush.msra.mxu0 %v546
      %570 = vmatpush.msra.mxu0 %v545
      %571 = vmatpush.msra.mxu0 %v544
      %572 = vmatpush.msra.mxu0 %v543
      %573 = vmatpush.msra.mxu0 %v542
      %574 = vmatmul.f32.gmra.mxu0 %v526
      %v575 = vpop.f32.mrf.mxu0
      %v576 = vadd.f32 0.0, %v575
      %577 = vmatmul.f32.gmra.mxu0 %v527
      %v578 = vpop.f32.mrf.mxu0
      %v579 = vadd.f32 0.0, %v578
      %580 = vmatmul.f32.gmra.mxu0 %v528
      %v581 = vpop.f32.mrf.mxu0
      %v582 = vadd.f32 0.0, %v581
      %583 = vmatmul.f32.gmra.mxu0 %v529
      %v584 = vpop.f32.mrf.mxu0
      %v585 = vadd.f32 0.0, %v584
      %586 = vmatmul.f32.gmra.mxu0 %v530
      %v587 = vpop.f32.mrf.mxu0
      %v588 = vadd.f32 0.0, %v587
      %589 = vmatmul.f32.gmra.mxu0 %v531
      %v590 = vpop.f32.mrf.mxu0
      %v591 = vadd.f32 0.0, %v590
      %592 = vmatmul.f32.gmra.mxu0 %v532
      %v593 = vpop.f32.mrf.mxu0
      %v594 = vadd.f32 0.0, %v593
      %595 = vmatmul.f32.gmra.mxu0 %v533
      %v596 = vpop.f32.mrf.mxu0
      %v597 = vadd.f32 0.0, %v596
      %598 = vmatmul.f32.gmra.mxu0 %v534
      %v599 = vpop.f32.mrf.mxu0
      %v600 = vadd.f32 0.0, %v599
      %601 = vmatmul.f32.gmra.mxu0 %v535
      %v602 = vpop.f32.mrf.mxu0
      %v603 = vadd.f32 0.0, %v602
      %604 = vmatmul.f32.gmra.mxu0 %v536
      %v605 = vpop.f32.mrf.mxu0
      %v606 = vadd.f32 0.0, %v605
      %607 = vmatmul.f32.gmra.mxu0 %v537
      %v608 = vpop.f32.mrf.mxu0
      %v609 = vadd.f32 0.0, %v608
      %610 = vmatmul.f32.gmra.mxu0 %v538
      %v611 = vpop.f32.mrf.mxu0
      %v612 = vadd.f32 0.0, %v611
      %613 = vmatmul.f32.gmra.mxu0 %v539
      %v614 = vpop.f32.mrf.mxu0
      %v615 = vadd.f32 0.0, %v614
      %616 = vmatmul.f32.gmra.mxu0 %v540
      %v617 = vpop.f32.mrf.mxu0
      %v618 = vadd.f32 0.0, %v617
      %619 = vmatmul.f32.gmra.mxu0 %v541
      %v620 = vpop.f32.mrf.mxu0
      %v621 = vadd.f32 0.0, %v620
      %622 = vdwg.mxu0
      %623 = vmatpush.msra.mxu0 %v509
      %624 = vmatpush.msra.mxu0 %v508
      %625 = vmatpush.msra.mxu0 %v507
      %626 = vmatpush.msra.mxu0 %v506
      %627 = vmatpush.msra.mxu0 %v505
      %628 = vmatpush.msra.mxu0 %v504
      %629 = vmatpush.msra.mxu0 %v503
      %630 = vmatpush.msra.mxu0 %v502
      %631 = vmatpush.msra.mxu0 %v501
      %632 = vmatpush.msra.mxu0 %v500
      %633 = vmatpush.msra.mxu0 %v499
      %634 = vmatpush.msra.mxu0 %v498
      %635 = vmatpush.msra.mxu0 %v497
      %636 = vmatpush.msra.mxu0 %v496
      %637 = vmatpush.msra.mxu0 %v495
      %638 = vmatpush.msra.mxu0 %v494
      %639 = vmatmul.f32.gmra.mxu0 %v478
      %v640 = vpop.f32.mrf.mxu0
      %v641 = vadd.f32 %v576, %v640
      %642 = vmatmul.f32.gmra.mxu0 %v479
      %v643 = vpop.f32.mrf.mxu0
      %v644 = vadd.f32 %v579, %v643
      %645 = vmatmul.f32.gmra.mxu0 %v480
      %v646 = vpop.f32.mrf.mxu0
      %v647 = vadd.f32 %v582, %v646
      %648 = vmatmul.f32.gmra.mxu0 %v481
      %v649 = vpop.f32.mrf.mxu0
      %v650 = vadd.f32 %v585, %v649
      %651 = vmatmul.f32.gmra.mxu0 %v482
      %v652 = vpop.f32.mrf.mxu0
      %v653 = vadd.f32 %v588, %v652
      %654 = vmatmul.f32.gmra.mxu0 %v483
      %v655 = vpop.f32.mrf.mxu0
      %v656 = vadd.f32 %v591, %v655
      %657 = vmatmul.f32.gmra.mxu0 %v484
      %v658 = vpop.f32.mrf.mxu0
      %v659 = vadd.f32 %v594, %v658
      %660 = vmatmul.f32.gmra.mxu0 %v485
      %v661 = vpop.f32.mrf.mxu0
      %v662 = vadd.f32 %v597, %v661
      %663 = vmatmul.f32.gmra.mxu0 %v486
      %v664 = vpop.f32.mrf.mxu0
      %v665 = vadd.f32 %v600, %v664
      %666 = vmatmul.f32.gmra.mxu0 %v487
      %v667 = vpop.f32.mrf.mxu0
      %v668 = vadd.f32 %v603, %v667
      %669 = vmatmul.f32.gmra.mxu0 %v488
      %v670 = vpop.f32.mrf.mxu0
      %v671 = vadd.f32 %v606, %v670
      %672 = vmatmul.f32.gmra.mxu0 %v489
      %v673 = vpop.f32.mrf.mxu0
      %v674 = vadd.f32 %v609, %v673
      %675 = vmatmul.f32.gmra.mxu0 %v490
      %v676 = vpop.f32.mrf.mxu0
      %v677 = vadd.f32 %v612, %v676
      %678 = vmatmul.f32.gmra.mxu0 %v491
      %v679 = vpop.f32.mrf.mxu0
      %v680 = vadd.f32 %v615, %v679
      %681 = vmatmul.f32.gmra.mxu0 %v492
      %v682 = vpop.f32.mrf.mxu0
      %v683 = vadd.f32 %v618, %v682
      %684 = vmatmul.f32.gmra.mxu0 %v493
      %v685 = vpop.f32.mrf.mxu0
      %v686 = vadd.f32 %v621, %v685
      %687 = vdwg.mxu0
      %v688 = vld [vmem:[%s8] sm:$0x1]
      %v690 = vperm.slane %v688, 0
      %v692 = vadd.f32 %v641, %v690
      %v693 = vadd.f32 %v644, %v690
      %v694 = vadd.f32 %v647, %v690
      %v695 = vadd.f32 %v650, %v690
      %v696 = vadd.f32 %v653, %v690
      %v697 = vadd.f32 %v656, %v690
      %v698 = vadd.f32 %v659, %v690
      %v699 = vadd.f32 %v662, %v690
      %v700 = vadd.f32 %v665, %v690
      %v701 = vadd.f32 %v668, %v690
      %v702 = vadd.f32 %v671, %v690
      %v703 = vadd.f32 %v674, %v690
      %v704 = vadd.f32 %v677, %v690
      %v705 = vadd.f32 %v680, %v690
      %v706 = vadd.f32 %v683, %v690
      %v707 = vadd.f32 %v686, %v690
      %v708 = vmax.f32 %v692, 0.0
      %v709 = vmax.f32 %v693, 0.0
      %v710 = vmax.f32 %v694, 0.0
      %v711 = vmax.f32 %v695, 0.0
      %v712 = vmax.f32 %v696, 0.0
      %v713 = vmax.f32 %v697, 0.0
      %v714 = vmax.f32 %v698, 0.0
      %v715 = vmax.f32 %v699, 0.0
      %v716 = vmax.f32 %v700, 0.0
      %v717 = vmax.f32 %v701, 0.0
      %v718 = vmax.f32 %v702, 0.0
      %v719 = vmax.f32 %v703, 0.0
      %v720 = vmax.f32 %v704, 0.0
      %v721 = vmax.f32 %v705, 0.0
      %v722 = vmax.f32 %v706, 0.0
      %v723 = vmax.f32 %v707, 0.0
      %724 = vst [vmem:[#allocation14] sm:$0xff] %v708
      %725 = vst [vmem:[#allocation14 + $0x8] sm:$0xff] %v709
      %726 = vst [vmem:[#allocation14 + $0x10] sm:$0xff] %v710
      %727 = vst [vmem:[#allocation14 + $0x18] sm:$0xff] %v711
      %728 = vst [vmem:[#allocation14 + $0x20] sm:$0xff] %v712
      %729 = vst [vmem:[#allocation14 + $0x28] sm:$0xff] %v713
      %730 = vst [vmem:[#allocation14 + $0x30] sm:$0xff] %v714
      %731 = vst [vmem:[#allocation14 + $0x38] sm:$0xff] %v715
      %732 = vst [vmem:[#allocation14 + $0x40] sm:$0xff] %v716
      %733 = vst [vmem:[#allocation14 + $0x48] sm:$0xff] %v717
      %734 = vst [vmem:[#allocation14 + $0x50] sm:$0xff] %v718
      %735 = vst [vmem:[#allocation14 + $0x58] sm:$0xff] %v719
      %736 = vst [vmem:[#allocation14 + $0x60] sm:$0xff] %v720
      %737 = vst [vmem:[#allocation14 + $0x68] sm:$0xff] %v721
      %738 = vst [vmem:[#allocation14 + $0x70] sm:$0xff] %v722
      %739 = vst [vmem:[#allocation14 + $0x78] sm:$0xff] %v723
    $region57: #{_sage_block_call.1} parent=1 // pred_fallthru
      _
    // Predicated region
    $region58: #{_sage_block_call.1} parent=1 // pred_check
      _
    $region59: #{_sage_block_call.1} parent=1 // pred_check_branch
      %741 = sbr.rel (0) target = $region61
    $region60: #{_sage_block_call.1} parent=1 // pred_region
      %743 = vsyncadd [#allocation8], 0
      %s744 = sshll.u32 [#allocation14], 4
      %s745 = int_to_ptr.vmem [resolvable:$true] %s744
      %s746 = sshll.u32 %s9, 4
      %s747 = int_to_ptr.hbm [resolvable:$true] %s746
      %752 = dma.vmem_to_hbm [thread:$0]  %s745, 2048, %s747, [#allocation8], 128, 128, 8
    $region61: #{_sage_block_call.1} parent=1 // pred_fallthru
      _
    // Predicated region
    $region62: #{_sage_block_call.1} parent=1 // pred_check
      _
    $region63: #{_sage_block_call.1} parent=1 // pred_check_branch
      %754 = sbr.rel (0) target = $region65
    $region64: #{_sage_block_call.1} parent=1 // pred_region
      %756 = dma.done [#allocation8], 2048
    $region65: #{_sage_block_call.1} parent=1 // pred_fallthru
      _
    %757 = vsyncpa [#allocation7], 1
    %758 = vsyncpa [#allocation10], 1
    %759 = vsyncpa [#allocation13], 1
    %760 = vsyncpa [#allocation8], 1

</llo_original>
